<compile_context>
chip_gen: v6e
topology: v6e:2x2x1
jax: 0.10.0
libtpu: 0.0.40
codegen_flags: <defaults>
</compile_context>

<pallas_src>
import jax
import jax.numpy as jnp
from jax.experimental import pallas as pl
from jax.experimental.pallas import tpu as pltpu


def _round_up(x, m):
    return ((x + m - 1) // m) * m


def _encoder_kernel(embed_ref, wt_ref, bias_out_ref, out_ref):
    # embed_ref    : (TB, E)  batch tile of input rows
    # wt_ref       : (E, F)   VMEM-resident pre-transposed weight
    # bias_out_ref : (1, F)   f32 precomputed bias @ W.T (row correction)
    # out_ref      : (TB, F)  output tile
    acc = jnp.dot(embed_ref[...], wt_ref[...], preferred_element_type=jnp.float32)
    out_ref[...] = (acc - bias_out_ref[...]).astype(out_ref.dtype)


def prepare_encoder_params(bias, weight, dtype=None):
    """One-time parameter prep — call at param setup, NOT per forward call.

    bias: (E,), weight: (F, E) (nn.Linear convention).
    Returns (wt, bias_out): wt (E, F) pre-transposed, bias_out (1, F) f32.
    """
    w_f32 = weight.astype(jnp.float32)
    bias_out = (bias.astype(jnp.float32) @ w_f32.T).reshape(1, -1)   # (1, F) f32
    wt = weight.T.astype(dtype if dtype is not None else weight.dtype)  # (E, F)
    return wt, bias_out


def encoder_forward(embed, wt, bias_out, *, tb=1024):
    """Equivalent of Encoder.forward: (embed - bias) @ weight.T.

    embed: (B, E); wt: (E, F) pre-transposed weight; bias_out: (1, F) f32.
    """
    B, E = embed.shape
    E2, F_ = wt.shape
    assert E == E2 and bias_out.shape == (1, F_)
    out_dtype = embed.dtype
    itemsize = jnp.dtype(out_dtype).itemsize

    # Batch tile: >= 2 grid steps whenever B allows (use both TCs on v7x),
    # capped at tb (HBM-bound: big tiles amortize per-step overhead).
    if B <= 8:
        TB = B
    else:
        TB = max(8, min(tb, _round_up(pl.cdiv(B, 2), 8)))

    def footprint(t):
        return (2 * t * E * itemsize       # input tiles   (double-buffered)
                + 2 * t * F_ * itemsize    # output tiles  (double-buffered)
                + 2 * E * F_ * itemsize    # resident weight (assume 2x-buffered)
                + 2 * F_ * 4)              # resident bias correction

    VMEM_BUDGET = 56 << 20   # conservative: v7x has 64 MiB per TensorCore
    while TB > 8 and footprint(TB) > VMEM_BUDGET:
        TB = max(8, _round_up(TB // 2, 8))

    grid = (pl.cdiv(B, TB),)

    vmem_needed = footprint(TB)
    vmem_limit = None
    if vmem_needed > (12 << 20):   # near v5e's 16 MiB default scoped limit
        vmem_limit = min(int(vmem_needed * 1.5), VMEM_BUDGET)

    return pl.pallas_call(
        _encoder_kernel,
        out_shape=jax.ShapeDtypeStruct((B, F_), out_dtype),
        grid_spec=pltpu.PrefetchScalarGridSpec(
            num_scalar_prefetch=0,
            grid=grid,
            in_specs=[
                pl.BlockSpec((TB, E), lambda i: (i, 0)),   # batch-tiled input
                pl.BlockSpec((E, F_), lambda i: (0, 0)),   # resident weight
                pl.BlockSpec((1, F_), lambda i: (0, 0)),   # resident bias@W.T
            ],
            out_specs=pl.BlockSpec((TB, F_), lambda i: (i, 0)),
        ),
        compiler_params=pltpu.CompilerParams(
            dimension_semantics=("parallel",),
            vmem_limit_bytes=vmem_limit,
        ),
        cost_estimate=pl.CostEstimate(
            flops=2 * B * E * F_,
            transcendentals=0,
            bytes_accessed=itemsize * (B * E + E * F_ + B * F_) + 4 * F_,
        ),
    )(embed, wt, bias_out)


if __name__ == "__main__":
    key = jax.random.PRNGKey(0)
    k_embed, k_bias, k_w, k_embed2 = jax.random.split(key, 4)

    # Small shapes consistent with the module: batch=8, embed_size=32, num_features=16
    B, E, F_ = 8, 32, 16
    embed = jax.random.normal(k_embed, (B, E), dtype=jnp.float32)
    bias = jax.random.normal(k_bias, (E,), dtype=jnp.float32) * 0.1
    weight = jax.random.normal(k_w, (F_, E), dtype=jnp.float32) * (1.0 / (E ** 0.5))

    # One-time parameter prep (hoisted out of the forward path).
    wt, bias_out = prepare_encoder_params(bias, weight)
    wt = jax.block_until_ready(wt)
    bias_out = jax.block_until_ready(bias_out)

    out = jax.block_until_ready(encoder_forward(embed, wt, bias_out))
    ref = (embed - bias[None, :]) @ weight.T
    assert out.shape == (B, F_)
    assert jnp.allclose(out, ref, atol=1e-5, rtol=1e-5)

    # Second check: non-multiple batch to exercise the ragged last-block path
    # (no wrapper-side padding or output slicing anymore).
    B2 = 1037
    embed2 = jax.random.normal(k_embed2, (B2, E), dtype=jnp.float32)
    out2 = jax.block_until_ready(encoder_forward(embed2, wt, bias_out))
    ref2 = (embed2 - bias[None, :]) @ weight.T
    assert out2.shape == (B2, F_)
    assert jnp.allclose(out2, ref2, atol=1e-5, rtol=1e-5)

    print("KERNEL_OK")
</pallas_src>

<mosaic_0001>
module attributes {stable_mosaic.version = 11 : i64} {
  func.func @_encoder_kernel(%arg0: i32, %arg1: memref<8x32xf32, #tpu.memory_space<vmem>>, %arg2: memref<32x16xf32, #tpu.memory_space<vmem>>, %arg3: memref<1x16xf32, #tpu.memory_space<vmem>>, %arg4: memref<8x16xf32, #tpu.memory_space<vmem>>) attributes {dimension_semantics = [#tpu.dimension_semantics<parallel>], iteration_bounds = array<i64: 1>, scalar_prefetch = 0 : i64, scratch_operands = 0 : i64, tpu.core_type = #tpu.core_type<tc>, window_params = [{transform_indices = @transform_0, window_bounds = array<i64: 8, 32>}, {pipeline_mode = #tpu.pipeline_mode<synchronous>, transform_indices = @transform_1, window_bounds = array<i64: 32, 16>}, {pipeline_mode = #tpu.pipeline_mode<synchronous>, transform_indices = @transform_2, window_bounds = array<i64: 1, 16>}, {transform_indices = @transform_3, window_bounds = array<i64: 8, 16>}]} {
    %c0 = arith.constant 0 : index
    %c0_0 = arith.constant 0 : index
    %0 = vector.load %arg1[%c0, %c0_0] : memref<8x32xf32, #tpu.memory_space<vmem>>, vector<8x32xf32>
    %c0_1 = arith.constant 0 : index
    %c0_2 = arith.constant 0 : index
    %1 = vector.load %arg2[%c0_1, %c0_2] : memref<32x16xf32, #tpu.memory_space<vmem>>, vector<32x16xf32>
    %cst = arith.constant dense<0.000000e+00> : vector<8x16xf32>
    %2 = tpu.matmul %0, %1, %cst {dimension_numbers = #tpu.dot_dimension_numbers<[1], [0], [0], [1], [0, 0, 1, 1], [], []>} : vector<8x32xf32>, vector<32x16xf32>, vector<8x16xf32> -> vector<8x16xf32>
    %c0_3 = arith.constant 0 : index
    %c0_4 = arith.constant 0 : index
    %3 = vector.load %arg3[%c0_3, %c0_4] : memref<1x16xf32, #tpu.memory_space<vmem>>, vector<1x16xf32>
    %4 = vector.broadcast %3 : vector<1x16xf32> to vector<8x16xf32>
    %5 = arith.subf %2, %4 : vector<8x16xf32>
    %c0_5 = arith.constant 0 : index
    %c0_6 = arith.constant 0 : index
    %6 = vector.load %arg4[%c0_5, %c0_6] : memref<8x16xf32, #tpu.memory_space<vmem>>, vector<8x16xf32>
    tpu.vector_store %arg4[%c0_5, %c0_6], %5 {strides = array<i32>} : memref<8x16xf32, #tpu.memory_space<vmem>>, vector<8x16xf32>,
    return
  }
  func.func @transform_0(%arg0: i32) -> (i32, i32) {
    %c0_i32 = arith.constant 0 : i32
    %c0_i32_0 = arith.constant 0 : i32
    return %arg0, %c0_i32 : i32, i32
  }
  func.func @transform_1(%arg0: i32) -> (i32, i32) {
    %c0_i32 = arith.constant 0 : i32
    %c0_i32_0 = arith.constant 0 : i32
    %c0_i32_1 = arith.constant 0 : i32
    return %c0_i32, %c0_i32_0 : i32, i32
  }
  func.func @transform_2(%arg0: i32) -> (i32, i32) {
    %c0_i32 = arith.constant 0 : i32
    %c0_i32_0 = arith.constant 0 : i32
    %c0_i32_1 = arith.constant 0 : i32
    return %c0_i32, %c0_i32_0 : i32, i32
  }
  func.func @transform_3(%arg0: i32) -> (i32, i32) {
    %c0_i32 = arith.constant 0 : i32
    %c0_i32_0 = arith.constant 0 : i32
    return %arg0, %c0_i32 : i32, i32
  }
}

</mosaic_0001>

<llo_original>
// kernel: tpu_custom_call.1
$region0: #{tpu_custom_call.1}
  #allocation0 [shape = 'u32[]', space=smem, size = 0x4, offset = 0x4, fixed_abs, tag = 'smem constant byte address 0x4 - core index']
  #allocation1 [shape = 'u32[144,128]{1,0:T(1,128)}', space=vmem, size = 0x12000, scoped, tag = 'internal scratch']
  %s0 = inlined_call_operand.vmem [shape: f32[8,32], index: 0, kind: input, shape index: {}]
  %s1 = inlined_call_operand.vmem [shape: f32[32,16], index: 1, kind: input, shape index: {}]
  %s2 = inlined_call_operand.vmem [shape: f32[1,16], index: 2, kind: input, shape index: {}]
  %s3 = inlined_call_operand.hbm [shape: f32[8,16], index: 3, kind: output, shape index: {}]
  %s4 = sld [smem:[#allocation0]]
  $region22: #{tpu_custom_call.1} parent=0
    _
  %s6 = ssub.s32 1, %s4
  %s7 = scalar_select 0, %s6, %s4
  $region1: #{tpu_custom_call.1} parent=0
    #allocation2 [shape = 'u8[4096]{0}', space=vmem, size = 0x1000, scoped, tag = 'output window, operand 0, single buffered']
    #allocation3 [shape = 's32[1]{0}', space=sflag, size = 0x4, scoped, tag = 'scoped memory for tpu_custom_call.1']
    %8 = vsyncpa [#allocation3], 0
    // Predicated region
    $region2: #{tpu_custom_call.1} parent=1 // pred_check
      _
    $region3: #{tpu_custom_call.1} parent=1 // pred_check_branch
      %10 = sbr.rel (0) target = $region5
    $region4: #{tpu_custom_call.1} parent=1 // pred_region
      _
    $region5: #{tpu_custom_call.1} parent=1 // pred_fallthru
      _
    // Predicated region
    $region6: #{tpu_custom_call.1} parent=1 // pred_check
      _
    $region7: #{tpu_custom_call.1} parent=1 // pred_check_branch
      %12 = sbr.rel (0) target = $region9
    $region8: #{tpu_custom_call.1} parent=1 // pred_region
      _
    $region9: #{tpu_custom_call.1} parent=1 // pred_fallthru
      _
    // Predicated region
    $region10: #{tpu_custom_call.1} parent=1 // pred_check
      _
    $region11: #{tpu_custom_call.1} parent=1 // pred_check_branch
      %14 = sbr.rel (0) target = $region13
    $region12: #{tpu_custom_call.1} parent=1 // pred_region
      _
    $region13: #{tpu_custom_call.1} parent=1 // pred_fallthru
      _
    %v15 = vld [vmem:[%s0] sm:$0xff]
    %v16 = vld [vmem:[%s1] sm:$0xff]
    %v17 = vld [vmem:[%s1 + $0x8] sm:$0xff]
    %v18 = vld [vmem:[%s1 + $0x10] sm:$0xff]
    %v19 = vld [vmem:[%s1 + $0x18] sm:$0xff]
    %vm20 = vcmask 261120
    %v22 = vsel %vm20, %v15, 0
    %24 = vmatprep.subr.mxu0 0.0
    %25 = vmatpush1.msra.mxu0 0.0
    %26 = vmatprep.subr.mxu0 0.0
    %27 = vmatpush1.msra.mxu0 0.0
    %28 = vmatprep.subr.mxu0 0.0
    %29 = vmatpush1.msra.mxu0 0.0
    %30 = vmatprep.subr.mxu0 0.0
    %31 = vmatpush1.msra.mxu0 0.0
    %32 = vmatprep.subr.mxu0 0.0
    %33 = vmatpush1.msra.mxu0 0.0
    %34 = vmatprep.subr.mxu0 0.0
    %35 = vmatpush1.msra.mxu0 0.0
    %36 = vmatprep.subr.mxu0 0.0
    %37 = vmatpush1.msra.mxu0 0.0
    %38 = vmatprep.subr.mxu0 0.0
    %39 = vmatpush1.msra.mxu0 0.0
    %40 = vmatprep.subr.mxu0 0.0
    %41 = vmatpush1.msra.mxu0 0.0
    %42 = vmatprep.subr.mxu0 0.0
    %43 = vmatpush1.msra.mxu0 0.0
    %44 = vmatprep.subr.mxu0 0.0
    %45 = vmatpush1.msra.mxu0 0.0
    %46 = vmatprep.subr.mxu0 0.0
    %47 = vmatpush1.msra.mxu0 0.0
    %48 = vmatprep.subr.mxu0 0.0
    %49 = vmatpush1.msra.mxu0 %v19
    %50 = vmatprep.subr.mxu0 0.0
    %51 = vmatpush1.msra.mxu0 %v18
    %52 = vmatprep.subr.mxu0 0.0
    %53 = vmatpush1.msra.mxu0 %v17
    %54 = vmatprep.subr.mxu0 0.0
    %55 = vmatpush1.msra.mxu0 %v16
    %56 = vmatprep.subr.mxu0 0.0
    %57 = vmatpush2.msra.mxu0 0.0
    %58 = vmatprep.subr.mxu0 0.0
    %59 = vmatpush2.msra.mxu0 0.0
    %60 = vmatprep.subr.mxu0 0.0
    %61 = vmatpush2.msra.mxu0 0.0
    %62 = vmatprep.subr.mxu0 0.0
    %63 = vmatpush2.msra.mxu0 0.0
    %64 = vmatprep.subr.mxu0 0.0
    %65 = vmatpush2.msra.mxu0 0.0
    %66 = vmatprep.subr.mxu0 0.0
    %67 = vmatpush2.msra.mxu0 0.0
    %68 = vmatprep.subr.mxu0 0.0
    %69 = vmatpush2.msra.mxu0 0.0
    %70 = vmatprep.subr.mxu0 0.0
    %71 = vmatpush2.msra.mxu0 0.0
    %72 = vmatprep.subr.mxu0 0.0
    %73 = vmatpush2.msra.mxu0 0.0
    %74 = vmatprep.subr.mxu0 0.0
    %75 = vmatpush2.msra.mxu0 0.0
    %76 = vmatprep.subr.mxu0 0.0
    %77 = vmatpush2.msra.mxu0 0.0
    %78 = vmatprep.subr.mxu0 0.0
    %79 = vmatpush2.msra.mxu0 0.0
    %80 = vmatprep.subr.mxu0 0.0
    %81 = vmatpush2.msra.mxu0 0.0
    %82 = vmatprep.subr.mxu0 0.0
    %83 = vmatpush2.msra.mxu0 0.0
    %84 = vmatprep.subr.mxu0 0.0
    %85 = vmatpush2.msra.mxu0 0.0
    %86 = vmatprep.subr.mxu0 0.0
    %87 = vmatpush2.msra.mxu0 0.0
    %88 = vmatprep.mubr.f32.mxu0 0.0
    %89 = vmatmul.mubr.f32.gmra.mxu0 %v22
    %v90 = vpop.f32.mrf.mxu0
    %v91 = vadd.f32 0.0, %v90
    %v92 = vpop.f32.mrf.mxu0
    %93 = vdwg.mxu0
    %v94 = vld [vmem:[%s2] sm:$0x1]
    %v96 = vlaneseq
    %v97 = vshrl.u32 %v96, 7
    %v98 = vsub.s32 0, %v97
    %v99 = vrot.slane %v94, %v98
    %v101 = vsub.f32 %v91, %v99
    %vm102 = vcmask 130048
    %103 = vst.msk [vmem:[#allocation2] sm:$0xff] %vm102, %v101
    // Predicated region
    $region14: #{tpu_custom_call.1} parent=1 // pred_check
      _
    $region15: #{tpu_custom_call.1} parent=1 // pred_check_branch
      %105 = sbr.rel (0) target = $region17
    $region16: #{tpu_custom_call.1} parent=1 // pred_region
      %s107 = ssub.s32 128, 128
      %108 = vsyncadd [#allocation3], %s107
      %s110 = sshll.u32 [#allocation2], 4
      %s111 = int_to_ptr.vmem [resolvable:$true] %s110
      %113 = dma.vmem_to_hbm [thread:$0]  %s111, 128, %s3, [#allocation3]
    $region17: #{tpu_custom_call.1} parent=1 // pred_fallthru
      _
    // Predicated region
    $region18: #{tpu_custom_call.1} parent=1 // pred_check
      _
    $region19: #{tpu_custom_call.1} parent=1 // pred_check_branch
      %115 = sbr.rel (0) target = $region21
    $region20: #{tpu_custom_call.1} parent=1 // pred_region
      %116 = dma.done [#allocation3], 128
    $region21: #{tpu_custom_call.1} parent=1 // pred_fallthru
      _
    %117 = vsyncpa [#allocation3], 1

</llo_original>
